<compile_context>
chip_gen: v6e
topology: v6e:2x2x1
jax: 0.10.0
libtpu: 0.0.40
codegen_flags: <defaults>
</compile_context>

<pallas_src>
import math

import jax
import jax.numpy as jnp
from jax import lax
from jax.experimental import pallas as pl
from jax.experimental.pallas import tpu as pltpu


_TEMP_VOCAB = 32  # day_size (=32) is the largest index range among month/day/weekday/hour/minute


def _sinusoid_table(n_rows: int, d_model: int) -> jnp.ndarray:
    """Fixed sin/cos table — identical formula to PositionalEmbedding / FixedEmbedding."""
    pos = jnp.arange(n_rows, dtype=jnp.float32)[:, None]                           # (n, 1)
    div = jnp.exp(jnp.arange(0, d_model, 2, dtype=jnp.float32)
                  * -(math.log(10000.0) / d_model))                                # (d/2,)
    ang = pos * div                                                                # (n, d/2)
    tab = jnp.zeros((n_rows, d_model), jnp.float32)
    tab = tab.at[:, 0::2].set(jnp.sin(ang))
    tab = tab.at[:, 1::2].set(jnp.cos(ang))
    return tab


def _data_embedding_kernel(x_ref, xm_ref, w_ref, pe_ref, o_ref):
    # x_ref : (TB, L, C)       float32  value series for TB batch elements
    # xm_ref: (TB, L, F)       int32    time-feature indices (month, day, weekday, hour, ...)
    # w_ref : (3C + 32F, TD)   float32  fused weight: [conv tap -1 | tap 0 | tap +1 | F x 32-row table]
    # pe_ref: (L, TD)          float32  positional embedding + conv bias (pre-fused constant)
    # o_ref : (TB, L, TD)
    x = x_ref[...]
    xm = xm_ref[...]
    TB, L, C = x.shape
    F = xm.shape[-1]

    # Circular +-1 shifts along the sequence axis (per batch element). Explicit slice+concat is exact
    # for any L (no dependence on sublane padding behaviour).
    x_prev = jnp.concatenate([x[:, L - 1:, :], x[:, :L - 1, :]], axis=1)   # row t -> x[(t-1) % L]
    x_next = jnp.concatenate([x[:, 1:, :], x[:, :1, :]], axis=1)           # row t -> x[(t+1) % L]

    # Gather-free temporal embedding: each time feature gets its own 32-lane one-hot slot; the matching
    # weight rows are F stacked copies of the fixed sinusoid table, so onehot @ rows == sum of lookups.
    # NOTE: feature values outside [0, 32) contribute zero (same bound as the original 32-row tables).
    vals = lax.broadcasted_iota(jnp.int32, (TB, L, _TEMP_VOCAB), 2)
    pieces = [x_prev, x, x_next]
    for j in range(F):                                                      # static unroll, F ~ 4-5
        pieces.append((xm[:, :, j:j + 1] == vals).astype(x.dtype))
    lhs = jnp.concatenate(pieces, axis=-1)                                  # (TB, L, 3C + 32F)
    K = lhs.shape[-1]

    # Single fused MXU matmul: conv taps + temporal embedding in one (TB*L, K) @ (K, TD) dot.
    acc = jnp.dot(lhs.reshape(TB * L, K), w_ref[...],
                  preferred_element_type=jnp.float32)                       # (TB*L, TD)

    # Positional embedding + conv bias, broadcast over the TB batch elements.
    acc = acc.reshape(TB, L, acc.shape[-1]) + pe_ref[...][None]
    o_ref[...] = acc.astype(o_ref.dtype)


def _select_tiles(B, L, C, F, D, K):
    """Pick (TB, TD) block sizes and return a VMEM-usage estimate in bytes."""
    b4 = 4
    budget = 32 * 1024 * 1024          # tile budget; conservative for v7x's 64 MiB physical VMEM

    def vmem_bytes(tb, td):
        streamed = tb * L * (C + F) * b4 + tb * L * td * b4      # x + x_mark + output block
        resident = (K + L) * td * b4                             # fused weight + pe_bias block
        return 2 * (streamed + resident)                         # default double-buffering

    # Prefer a single lane-dense D block (TD = D); split in halves (multiples of 128) only if needed.
    TD = D
    while vmem_bytes(1, TD) > budget and TD % 256 == 0:
        TD //= 2

    # Batch block: >= 256 MXU rows and ~2 MiB output tiles, capped by B, the VMEM budget and — when
    # B >= 2 — by keeping at least two batch blocks (v7x has 2 TensorCores on the parallel axis).
    tb = min(B, max(1, -(-256 // L), (2 * 1024 * 1024) // max(1, L * TD * b4)))
    while tb > 1 and vmem_bytes(tb, TD) > budget:
        tb -= 1
    if B >= 2:
        tb = min(tb, B // 2)
    tb = max(tb, 1)
    while B % tb != 0:                 # keep the grid exact (no partial batch blocks)
        tb -= 1
    return tb, TD, vmem_bytes(tb, TD)


def data_embedding(x, x_mark, w_conv, b_conv, *, out_dtype=None):
    """DataEmbedding forward (eval mode).

    x      : [B, L, C]  float32 value series (c_in = C)
    x_mark : [B, L, F]  integer time-feature indices (month, day, weekday, hour[, minute])
    w_conv : [D, C, 3]  Conv1d weight (torch layout: out_ch, in_ch, kernel)
    b_conv : [D]        Conv1d bias
    returns: [B, L, D]  (dtype out_dtype, default x.dtype; pass jnp.bfloat16 to halve the output write)
    """
    B, L, C = x.shape
    F = x_mark.shape[-1]
    D = w_conv.shape[0]
    K = 3 * C + _TEMP_VOCAB * F
    out_dtype = x.dtype if out_dtype is None else out_dtype

    # Parameter-side constants only (tiny; no wrapper-side HBM pass over the data tensors).
    taps = jnp.transpose(w_conv, (2, 1, 0)).reshape(3 * C, D)       # rows: tap -1 | tap 0 | tap +1
    temb = _sinusoid_table(_TEMP_VOCAB, D)                          # shared fixed 32-row table
    w_fused = jnp.concatenate([taps] + [temb] * F, axis=0)          # (3C + 32F, D)
    pe_bias = _sinusoid_table(L, D) + b_conv[None, :].astype(jnp.float32)   # pos emb + conv bias

    TB, TD, vmem_est = _select_tiles(B, L, C, F, D, K)
    n_b, n_d = B // TB, D // TD

    grid_spec = pltpu.PrefetchScalarGridSpec(
        num_scalar_prefetch=0,
        grid=(n_b, n_d),                                            # batch blocks leading (megacore/v7x)
        in_specs=[
            pl.BlockSpec((TB, L, C), lambda b, d: (b, 0, 0)),       # x, native [B, L, C] layout
            pl.BlockSpec((TB, L, F), lambda b, d: (b, 0, 0)),       # x_mark, native layout
            pl.BlockSpec((K, TD), lambda b, d: (0, d)),             # fused weight (fetched once if n_d==1)
            pl.BlockSpec((L, TD), lambda b, d: (0, d)),             # pos-emb + bias (fetched once if n_d==1)
        ],
        out_specs=pl.BlockSpec((TB, L, TD), lambda b, d: (b, 0, d)),
    )

    out = pl.pallas_call(
        _data_embedding_kernel,
        out_shape=jax.ShapeDtypeStruct((B, L, D), out_dtype),
        grid_spec=grid_spec,
        compiler_params=pltpu.CompilerParams(
            dimension_semantics=("parallel", "parallel"),
            vmem_limit_bytes=int(min(max(vmem_est + (8 << 20), 16 << 20), 48 << 20)),
        ),
    )(x, x_mark.astype(jnp.int32), w_fused, pe_bias)

    # Dropout(p=0.1): identity in eval/inference.
    # TODO(synk): training-mode dropout (pltpu.prng_seed + stateful_bernoulli masking) not implemented.
    # TODO(synk): embed_type != 'fixed' (learned nn.Embedding temporal tables) not supported.
    return out


if __name__ == "__main__":
    key = jax.random.PRNGKey(0)
    kx, kw, kb, k1, k2, k3, k4 = jax.random.split(key, 7)

    B, L, C, D = 4, 16, 4, 128   # batch, seq_len, c_in, d_model (lane-dense)

    x = jax.random.normal(kx, (B, L, C), dtype=jnp.float32)
    x_mark = jnp.concatenate([
        jax.random.randint(k1, (B, L, 1), 0, 13),   # month
        jax.random.randint(k2, (B, L, 1), 0, 32),   # day
        jax.random.randint(k3, (B, L, 1), 0, 7),    # weekday
        jax.random.randint(k4, (B, L, 1), 0, 24),   # hour
    ], axis=-1).astype(jnp.int32)

    # Conv1d(c_in=C -> d_model=D, kernel_size=3) parameters (kaiming-like scale; init value irrelevant).
    fan_in = C * 3
    w_conv = jax.random.normal(kw, (D, C, 3), dtype=jnp.float32) * (2.0 / fan_in) ** 0.5
    b_conv = jax.random.uniform(kb, (D,), minval=-1.0 / fan_in ** 0.5,
                                maxval=1.0 / fan_in ** 0.5, dtype=jnp.float32)

    out = jax.block_until_ready(data_embedding(x, x_mark, w_conv, b_conv))

    # Pure-JAX reference of the same forward pass.
    hp = lax.Precision.HIGHEST
    x_prev = jnp.roll(x, 1, axis=1)
    x_next = jnp.roll(x, -1, axis=1)
    tok = (jnp.einsum("blc,dc->bld", x_prev, w_conv[:, :, 0], precision=hp)
           + jnp.einsum("blc,dc->bld", x, w_conv[:, :, 1], precision=hp)
           + jnp.einsum("blc,dc->bld", x_next, w_conv[:, :, 2], precision=hp)
           + b_conv[None, None, :])
    temb = _sinusoid_table(_TEMP_VOCAB, D)
    temporal = sum(temb[x_mark[..., j]] for j in range(x_mark.shape[-1]))
    ref = tok + _sinusoid_table(L, D)[None] + temporal

    assert out.shape == (B, L, D)
    max_err = float(jnp.max(jnp.abs(out - ref)))
    assert jnp.allclose(out, ref, atol=2e-4, rtol=2e-4), max_err
    print("KERNEL_OK")
</pallas_src>

<mosaic_0001>
module attributes {stable_mosaic.version = 11 : i64} {
  func.func @_data_embedding_kernel(%arg0: i32, %arg1: i32, %arg2: memref<2x16x4xf32, #tpu.memory_space<vmem>>, %arg3: memref<2x16x4xi32, #tpu.memory_space<vmem>>, %arg4: memref<140x128xf32, #tpu.memory_space<vmem>>, %arg5: memref<16x128xf32, #tpu.memory_space<vmem>>, %arg6: memref<2x16x128xf32, #tpu.memory_space<vmem>>) attributes {dimension_semantics = [#tpu.dimension_semantics<parallel>, #tpu.dimension_semantics<parallel>], iteration_bounds = array<i64: 2, 1>, scalar_prefetch = 0 : i64, scratch_operands = 0 : i64, tpu.core_type = #tpu.core_type<tc>, window_params = [{transform_indices = @transform_0, window_bounds = array<i64: 2, 16, 4>}, {transform_indices = @transform_1, window_bounds = array<i64: 2, 16, 4>}, {transform_indices = @transform_2, window_bounds = array<i64: 140, 128>}, {transform_indices = @transform_3, window_bounds = array<i64: 16, 128>}, {transform_indices = @transform_4, window_bounds = array<i64: 2, 16, 128>}]} {
    %c0 = arith.constant 0 : index
    %c0_0 = arith.constant 0 : index
    %c0_1 = arith.constant 0 : index
    %0 = vector.load %arg2[%c0, %c0_0, %c0_1] : memref<2x16x4xf32, #tpu.memory_space<vmem>>, vector<2x16x4xf32>
    %c0_2 = arith.constant 0 : index
    %c0_3 = arith.constant 0 : index
    %c0_4 = arith.constant 0 : index
    %1 = vector.load %arg3[%c0_2, %c0_3, %c0_4] : memref<2x16x4xi32, #tpu.memory_space<vmem>>, vector<2x16x4xi32>
    %2 = vector.extract_strided_slice %0 {offsets = [0, 15, 0], sizes = [2, 1, 4], strides = [1, 1, 1]} : vector<2x16x4xf32> to vector<2x1x4xf32>
    %3 = vector.extract_strided_slice %0 {offsets = [0, 0, 0], sizes = [2, 15, 4], strides = [1, 1, 1]} : vector<2x16x4xf32> to vector<2x15x4xf32>
    %4 = tpu.concatenate %2, %3 in 1 : vector<2x1x4xf32>, vector<2x15x4xf32> -> vector<2x16x4xf32>
    %5 = vector.extract_strided_slice %0 {offsets = [0, 1, 0], sizes = [2, 15, 4], strides = [1, 1, 1]} : vector<2x16x4xf32> to vector<2x15x4xf32>
    %6 = vector.extract_strided_slice %0 {offsets = [0, 0, 0], sizes = [2, 1, 4], strides = [1, 1, 1]} : vector<2x16x4xf32> to vector<2x1x4xf32>
    %7 = tpu.concatenate %5, %6 in 1 : vector<2x15x4xf32>, vector<2x1x4xf32> -> vector<2x16x4xf32>
    %8 = tpu.iota {dimensions = array<i32: 2>} : vector<2x16x32xi32>
    %9 = vector.extract_strided_slice %1 {offsets = [0, 0, 0], sizes = [2, 16, 1], strides = [1, 1, 1]} : vector<2x16x4xi32> to vector<2x16x1xi32>
    %10 = vector.broadcast %9 : vector<2x16x1xi32> to vector<2x16x32xi32>
    %11 = arith.cmpi eq, %10, %8 : vector<2x16x32xi32>
    %12 = arith.extui %11 : vector<2x16x32xi1> to vector<2x16x32xi32>
    %13 = arith.sitofp %12 : vector<2x16x32xi32> to vector<2x16x32xf32>
    %14 = vector.extract_strided_slice %1 {offsets = [0, 0, 1], sizes = [2, 16, 1], strides = [1, 1, 1]} : vector<2x16x4xi32> to vector<2x16x1xi32>
    %15 = vector.broadcast %14 : vector<2x16x1xi32> to vector<2x16x32xi32>
    %16 = arith.cmpi eq, %15, %8 : vector<2x16x32xi32>
    %17 = arith.extui %16 : vector<2x16x32xi1> to vector<2x16x32xi32>
    %18 = arith.sitofp %17 : vector<2x16x32xi32> to vector<2x16x32xf32>
    %19 = vector.extract_strided_slice %1 {offsets = [0, 0, 2], sizes = [2, 16, 1], strides = [1, 1, 1]} : vector<2x16x4xi32> to vector<2x16x1xi32>
    %20 = vector.broadcast %19 : vector<2x16x1xi32> to vector<2x16x32xi32>
    %21 = arith.cmpi eq, %20, %8 : vector<2x16x32xi32>
    %22 = arith.extui %21 : vector<2x16x32xi1> to vector<2x16x32xi32>
    %23 = arith.sitofp %22 : vector<2x16x32xi32> to vector<2x16x32xf32>
    %24 = vector.extract_strided_slice %1 {offsets = [0, 0, 3], sizes = [2, 16, 1], strides = [1, 1, 1]} : vector<2x16x4xi32> to vector<2x16x1xi32>
    %25 = vector.broadcast %24 : vector<2x16x1xi32> to vector<2x16x32xi32>
    %26 = arith.cmpi eq, %25, %8 : vector<2x16x32xi32>
    %27 = arith.extui %26 : vector<2x16x32xi1> to vector<2x16x32xi32>
    %28 = arith.sitofp %27 : vector<2x16x32xi32> to vector<2x16x32xf32>
    %29 = tpu.concatenate %4, %0, %7, %13, %18, %23, %28 in 2 : vector<2x16x4xf32>, vector<2x16x4xf32>, vector<2x16x4xf32>, vector<2x16x32xf32>, vector<2x16x32xf32>, vector<2x16x32xf32>, vector<2x16x32xf32> -> vector<2x16x140xf32>
    %30 = vector.shape_cast %29 : vector<2x16x140xf32> to vector<32x140xf32>
    %c0_5 = arith.constant 0 : index
    %c0_6 = arith.constant 0 : index
    %31 = vector.load %arg4[%c0_5, %c0_6] : memref<140x128xf32, #tpu.memory_space<vmem>>, vector<140x128xf32>
    %cst = arith.constant dense<0.000000e+00> : vector<32x128xf32>
    %32 = tpu.matmul %30, %31, %cst {dimension_numbers = #tpu.dot_dimension_numbers<[1], [0], [0], [1], [0, 0, 1, 1], [], []>} : vector<32x140xf32>, vector<140x128xf32>, vector<32x128xf32> -> vector<32x128xf32>
    %33 = vector.shape_cast %32 : vector<32x128xf32> to vector<2x16x128xf32>
    %c0_7 = arith.constant 0 : index
    %c0_8 = arith.constant 0 : index
    %34 = vector.load %arg5[%c0_7, %c0_8] : memref<16x128xf32, #tpu.memory_space<vmem>>, vector<16x128xf32>
    %35 = vector.shape_cast %34 : vector<16x128xf32> to vector<1x16x128xf32>
    %36 = vector.broadcast %35 : vector<1x16x128xf32> to vector<2x16x128xf32>
    %37 = arith.addf %33, %36 : vector<2x16x128xf32>
    %c0_9 = arith.constant 0 : index
    %c0_10 = arith.constant 0 : index
    %c0_11 = arith.constant 0 : index
    %38 = vector.load %arg6[%c0_9, %c0_10, %c0_11] : memref<2x16x128xf32, #tpu.memory_space<vmem>>, vector<2x16x128xf32>
    tpu.vector_store %arg6[%c0_9, %c0_10, %c0_11], %37 {strides = array<i32>} : memref<2x16x128xf32, #tpu.memory_space<vmem>>, vector<2x16x128xf32>,
    return
  }
  func.func @transform_0(%arg0: i32, %arg1: i32) -> (i32, i32, i32) {
    %c0_i32 = arith.constant 0 : i32
    %c0_i32_0 = arith.constant 0 : i32
    %c0_i32_1 = arith.constant 0 : i32
    return %arg0, %c0_i32, %c0_i32_0 : i32, i32, i32
  }
  func.func @transform_1(%arg0: i32, %arg1: i32) -> (i32, i32, i32) {
    %c0_i32 = arith.constant 0 : i32
    %c0_i32_0 = arith.constant 0 : i32
    %c0_i32_1 = arith.constant 0 : i32
    return %arg0, %c0_i32, %c0_i32_0 : i32, i32, i32
  }
  func.func @transform_2(%arg0: i32, %arg1: i32) -> (i32, i32) {
    %c0_i32 = arith.constant 0 : i32
    %c0_i32_0 = arith.constant 0 : i32
    return %c0_i32, %arg1 : i32, i32
  }
  func.func @transform_3(%arg0: i32, %arg1: i32) -> (i32, i32) {
    %c0_i32 = arith.constant 0 : i32
    %c0_i32_0 = arith.constant 0 : i32
    return %c0_i32, %arg1 : i32, i32
  }
  func.func @transform_4(%arg0: i32, %arg1: i32) -> (i32, i32, i32) {
    %c0_i32 = arith.constant 0 : i32
    %c0_i32_0 = arith.constant 0 : i32
    return %arg0, %c0_i32, %arg1 : i32, i32, i32
  }
}

</mosaic_0001>

<llo_original>
// kernel: tpu_custom_call.1
$region0: #{tpu_custom_call.1}
  #allocation0 [shape = 'u32[]', space=smem, size = 0x4, offset = 0x4, fixed_abs, tag = 'smem constant byte address 0x4 - core index']
  #allocation1 [shape = 'u32[144,128]{1,0:T(1,128)}', space=vmem, size = 0x12000, scoped, tag = 'internal scratch']
  %s0 = inlined_call_operand.vmem [shape: f32[4,16,4], index: 0, kind: input, shape index: {}]
  %s1 = inlined_call_operand.vmem [shape: s32[4,16,4], index: 1, kind: input, shape index: {}]
  %s2 = inlined_call_operand.vmem [shape: f32[140,128], index: 2, kind: input, shape index: {}]
  %s3 = inlined_call_operand.vmem [shape: f32[16,128], index: 3, kind: input, shape index: {}]
  %s4 = inlined_call_operand.hbm [shape: f32[4,16,128], index: 4, kind: output, shape index: {}]
  %s5 = sld [smem:[#allocation0]]
  $region49: #{tpu_custom_call.1} parent=0
    _
  %s7 = ssub.s32 1, %s5
  %s8 = scalar_select 0, %s7, %s5
  $region1: #{tpu_custom_call.1} parent=0
    #allocation2 [shape = 'u8[32768]{0}', space=vmem, size = 0x8000, scoped, tag = 'output window, operand 0']
    #allocation3 [shape = 's32[2]{0}', space=sflag, size = 0x8, scoped, tag = 'scoped memory for tpu_custom_call.1']
    %9 = vsyncpa [#allocation3], 0
    %s10 = scalar_lea.sflag [#allocation3], 1
    %11 = vsyncpa %s10, 0
    loop: start=0, step=1, limit=4
    $region2: #{tpu_custom_call.1} parent=1 // loop_pre_header
      _
    $region3: #{tpu_custom_call.1} parent=1 // loop_header
      %s13 = sphi 0, %s17
      %p14 = scmp.ge.s32.totalorder %s13, 4
      %s20 = sphi 0, %s32
      %s21 = sphi 0, %s28
      %s22 = sphi 0, %s20
      %s23 = sphi 0, %s21
      %s24 = sphi 0, %s22
      %s25 = sphi 0, %s23
      %s35 = sphi 0, %s37
      %s38 = sphi 0, %s35
      %s39 = sphi 0, %s38
      %s55 = sphi 0, %s39
      %s61 = sphi 0, %s63
      %s64 = sphi 0, %s61
      %s65 = sphi 0, %s64
      %s81 = sphi 0, %s65
      %s87 = sphi 0, %s89
      %s90 = sphi 0, %s87
      %s91 = sphi 0, %s90
      %s107 = sphi 0, %s91
      %s113 = sphi 0, %s115
      %s116 = sphi 0, %s113
      %s117 = sphi 0, %s116
      %s133 = sphi 0, %s117
      %s141 = sphi 0, %s143
      %s144 = sphi 0, %s141
      %s145 = sphi 0, %s144
      %s161 = sphi 0, %s145
    $region4: #{tpu_custom_call.1} parent=1 // loop_header_branch
      %16 = sbr.rel (%p14) target = $region8
    $region5: #{tpu_custom_call.1} parent=1 // loop_body
      %s18 = ssub.s32 %s13, 1
      %s19 = ssub.s32 %s13, 2
      %s26 = sadd.s32 1, %s21
      %p27 = scmp.ge.s32.totalorder %s26, 1
      %s28 = scalar_select %p27, 0, %s26
      %s29 = sadd.s32 1, %s20
      %s30 = scalar_select %p27, %s29, %s20
      %p31 = scmp.ge.s32.totalorder %s30, 2
      %s32 = scalar_select %p31, 0, %s30
      %s33 = ssub.s32 %s20, %s32
      %p34 = scmp.eq.s32.totalorder %s33, 0
      %s36 = sadd.s32 %s35, 1
      %s37 = scalar_select %p34, %s35, %s36
      %p40 = pneg %p34
      %p41 = scmp.eq.s32.totalorder %s13, 1
      %p42 = por %p40, %p41
      %p43 = scmp.ne.s32.totalorder %s35, %s38
      %p44 = scmp.eq.s32.totalorder %s13, 0
      %p45 = por %p43, %p44
      %p46 = scmp.ne.s32.totalorder %s35, %s38
      %p47 = scmp.eq.s32.totalorder %s18, 1
      %p48 = por %p46, %p47
      %p49 = scmp.ne.s32.totalorder %s38, %s39
      %p50 = scmp.eq.s32.totalorder %s18, 0
      %p51 = por %p49, %p50
      %p52 = scmp.ne.s32.totalorder %s38, %s39
      %p53 = scmp.eq.s32.totalorder %s19, 1
      %p54 = por %p52, %p53
      %p56 = scmp.ne.s32.totalorder %s39, %s55
      %p57 = scmp.eq.s32.totalorder %s19, 0
      %p58 = por %p56, %p57
      %s59 = ssub.s32 %s20, %s32
      %p60 = scmp.eq.s32.totalorder %s59, 0
      %s62 = sadd.s32 %s61, 1
      %s63 = scalar_select %p60, %s61, %s62
      %p66 = pneg %p60
      %p67 = scmp.eq.s32.totalorder %s13, 1
      %p68 = por %p66, %p67
      %p69 = scmp.ne.s32.totalorder %s61, %s64
      %p70 = scmp.eq.s32.totalorder %s13, 0
      %p71 = por %p69, %p70
      %p72 = scmp.ne.s32.totalorder %s61, %s64
      %p73 = scmp.eq.s32.totalorder %s18, 1
      %p74 = por %p72, %p73
      %p75 = scmp.ne.s32.totalorder %s64, %s65
      %p76 = scmp.eq.s32.totalorder %s18, 0
      %p77 = por %p75, %p76
      %p78 = scmp.ne.s32.totalorder %s64, %s65
      %p79 = scmp.eq.s32.totalorder %s19, 1
      %p80 = por %p78, %p79
      %p82 = scmp.ne.s32.totalorder %s65, %s81
      %p83 = scmp.eq.s32.totalorder %s19, 0
      %p84 = por %p82, %p83
      %s85 = ssub.s32 %s21, %s28
      %p86 = scmp.eq.s32.totalorder %s85, 0
      %s88 = sadd.s32 %s87, 1
      %s89 = scalar_select %p86, %s87, %s88
      %p92 = pneg %p86
      %p93 = scmp.eq.s32.totalorder %s13, 1
      %p94 = por %p92, %p93
      %p95 = scmp.ne.s32.totalorder %s87, %s90
      %p96 = scmp.eq.s32.totalorder %s13, 0
      %p97 = por %p95, %p96
      %p98 = scmp.ne.s32.totalorder %s87, %s90
      %p99 = scmp.eq.s32.totalorder %s18, 1
      %p100 = por %p98, %p99
      %p101 = scmp.ne.s32.totalorder %s90, %s91
      %p102 = scmp.eq.s32.totalorder %s18, 0
      %p103 = por %p101, %p102
      %p104 = scmp.ne.s32.totalorder %s90, %s91
      %p105 = scmp.eq.s32.totalorder %s19, 1
      %p106 = por %p104, %p105
      %p108 = scmp.ne.s32.totalorder %s91, %s107
      %p109 = scmp.eq.s32.totalorder %s19, 0
      %p110 = por %p108, %p109
      %s111 = ssub.s32 %s21, %s28
      %p112 = scmp.eq.s32.totalorder %s111, 0
      %s114 = sadd.s32 %s113, 1
      %s115 = scalar_select %p112, %s113, %s114
      %p118 = pneg %p112
      %p119 = scmp.eq.s32.totalorder %s13, 1
      %p120 = por %p118, %p119
      %p121 = scmp.ne.s32.totalorder %s113, %s116
      %p122 = scmp.eq.s32.totalorder %s13, 0
      %p123 = por %p121, %p122
      %p124 = scmp.ne.s32.totalorder %s113, %s116
      %p125 = scmp.eq.s32.totalorder %s18, 1
      %p126 = por %p124, %p125
      %p127 = scmp.ne.s32.totalorder %s116, %s117
      %p128 = scmp.eq.s32.totalorder %s18, 0
      %p129 = por %p127, %p128
      %p130 = scmp.ne.s32.totalorder %s116, %s117
      %p131 = scmp.eq.s32.totalorder %s19, 1
      %p132 = por %p130, %p131
      %p134 = scmp.ne.s32.totalorder %s117, %s133
      %p135 = scmp.eq.s32.totalorder %s19, 0
      %p136 = por %p134, %p135
      %s137 = ssub.s32 %s20, %s32
      %s138 = ssub.s32 %s21, %s28
      %s139 = sor.u32 %s137, %s138
      %p140 = scmp.eq.s32.totalorder %s139, 0
      %s142 = sadd.s32 %s141, 1
      %s143 = scalar_select %p140, %s141, %s142
      %p146 = pneg %p140
      %p147 = scmp.eq.s32.totalorder %s13, 1
      %p148 = por %p146, %p147
      %p149 = scmp.ne.s32.totalorder %s141, %s144
      %p150 = scmp.eq.s32.totalorder %s13, 0
      %p151 = por %p149, %p150
      %p152 = scmp.ne.s32.totalorder %s141, %s144
      %p153 = scmp.eq.s32.totalorder %s18, 1
      %p154 = por %p152, %p153
      %p155 = scmp.ne.s32.totalorder %s144, %s145
      %p156 = scmp.eq.s32.totalorder %s18, 0
      %p157 = por %p155, %p156
      %p158 = scmp.ne.s32.totalorder %s144, %s145
      %p159 = scmp.eq.s32.totalorder %s19, 1
      %p160 = por %p158, %p159
      %p162 = scmp.ne.s32.totalorder %s145, %s161
      %p163 = scmp.eq.s32.totalorder %s19, 0
      %p164 = por %p162, %p163
      %p165 = scmp.le.s32.totalorder 1, %s13
      %p166 = scmp.lt.s32.totalorder %s13, 3
      %p167 = pnand %p165, %p166
      %p168 = pneg %p167
      // Predicated region
      $region9: #{tpu_custom_call.1} parent=5 // pred_check
        _
      $region10: #{tpu_custom_call.1} parent=5 // pred_check_branch
        %170 = sbr.rel (%p167) target = $region12
      $region11: #{tpu_custom_call.1} parent=5 // pred_region
        %s171 = ssub.s32 %s13, 1
        // Predicated region
        $region13: #{tpu_custom_call.1} parent=11 // pred_check
          %p172 = pneg %p103
        $region14: #{tpu_custom_call.1} parent=11 // pred_check_branch
          %174 = sbr.rel (%p172) target = $region16
        $region15: #{tpu_custom_call.1} parent=11 // pred_region
          %p175 = scmp.lt.s32.totalorder %s23, 0
          %s176 = scalar_select %p175, %s23, 0
          %s177 = smul.addr %s176, 8
          %s178 = scalar_lea.vmem %s2, %s177
        $region16: #{tpu_custom_call.1} parent=11 // pred_fallthru
          _
        // Predicated region
        $region17: #{tpu_custom_call.1} parent=11 // pred_check
          %p179 = pneg %p129
        $region18: #{tpu_custom_call.1} parent=11 // pred_check_branch
          %181 = sbr.rel (%p179) target = $region20
        $region19: #{tpu_custom_call.1} parent=11 // pred_region
          %p182 = scmp.lt.s32.totalorder %s23, 0
          %s183 = scalar_select %p182, %s23, 0
          %s184 = smul.addr %s183, 8
          %s185 = scalar_lea.vmem %s3, %s184
        $region20: #{tpu_custom_call.1} parent=11 // pred_fallthru
          _
      $region12: #{tpu_custom_call.1} parent=5 // pred_fallthru
        _
      %p186 = scmp.lt.s32.totalorder %s13, 2
      // Predicated region
      $region21: #{tpu_custom_call.1} parent=5 // pred_check
        %p187 = pneg %p186
      $region22: #{tpu_custom_call.1} parent=5 // pred_check_branch
        %189 = sbr.rel (%p187) target = $region24
      $region23: #{tpu_custom_call.1} parent=5 // pred_region
        // Predicated region
        $region25: #{tpu_custom_call.1} parent=23 // pred_check
          %p190 = pneg %p45
        $region26: #{tpu_custom_call.1} parent=23 // pred_check_branch
          %192 = sbr.rel (%p190) target = $region28
        $region27: #{tpu_custom_call.1} parent=23 // pred_region
          %s193 = smul.u32 2, %s20
          %p194 = scmp.lt.s32.totalorder %s193, 3
          %s195 = scalar_select %p194, %s193, 3
          %s196 = smul.addr %s195, 2
          %s197 = smul.addr %s196, 8
          %s198 = scalar_lea.vmem %s0, %s197
          %s199 = smul.u32 2, %s20
        $region28: #{tpu_custom_call.1} parent=23 // pred_fallthru
          _
        // Predicated region
        $region29: #{tpu_custom_call.1} parent=23 // pred_check
          %p200 = pneg %p71
        $region30: #{tpu_custom_call.1} parent=23 // pred_check_branch
          %202 = sbr.rel (%p200) target = $region32
        $region31: #{tpu_custom_call.1} parent=23 // pred_region
          %s203 = smul.u32 2, %s20
          %p204 = scmp.lt.s32.totalorder %s203, 3
          %s205 = scalar_select %p204, %s203, 3
          %s206 = smul.addr %s205, 2
          %s207 = smul.addr %s206, 8
          %s208 = scalar_lea.vmem %s1, %s207
          %s209 = smul.u32 2, %s20
        $region32: #{tpu_custom_call.1} parent=23 // pred_fallthru
          _
      $region24: #{tpu_custom_call.1} parent=5 // pred_fallthru
        _
      %p210 = scmp.le.s32.totalorder 1, %s13
      %p211 = scmp.lt.s32.totalorder %s13, 3
      %p212 = pnand %p210, %p211
      %p213 = pneg %p212
      // Predicated region
      $region33: #{tpu_custom_call.1} parent=5 // pred_check
        _
      $region34: #{tpu_custom_call.1} parent=5 // pred_check_branch
        %215 = sbr.rel (%p212) target = $region36
      $region35: #{tpu_custom_call.1} parent=5 // pred_region
        %s216 = ssub.s32 %s13, 1
        %s217 = smul.u32 2, %s22
        %p218 = scmp.lt.s32.totalorder %s217, 3
        %s219 = scalar_select %p218, %s217, 3
        %s220 = smul.addr %s219, 2
        %s221 = smul.addr %s220, 8
        %s222 = scalar_lea.vmem %s0, %s221
        %p223 = pneg %p51
        %p224 = pneg %p48
        %s225 = smul.u32 2, %s22
        %p226 = scmp.lt.s32.totalorder %s225, 3
        %s227 = scalar_select %p226, %s225, 3
        %s228 = smul.addr %s227, 2
        %s229 = smul.addr %s228, 8
        %s230 = scalar_lea.vmem %s1, %s229
        %p231 = pneg %p77
        %p232 = pneg %p74
        %p233 = scmp.lt.s32.totalorder %s23, 0
        %s234 = scalar_select %p233, %s23, 0
        %s235 = smul.addr %s234, 8
        %s236 = scalar_lea.vmem %s2, %s235
        %p237 = pneg %p103
        %p238 = pneg %p100
        %p239 = scmp.lt.s32.totalorder %s23, 0
        %s240 = scalar_select %p239, %s23, 0
        %s241 = smul.addr %s240, 8
        %s242 = scalar_lea.vmem %s3, %s241
        %p243 = pneg %p129
        %p244 = pneg %p126
        %p245 = pneg %p157
        %p246 = pneg %p154
        %s247 = sand.u32 %s144, 1
        %s248 = scalar_lea.sflag [#allocation3], %s247
        %s249 = sand.u32 %s144, 1
        %s250 = smul.addr %s249, 32
        %s251 = scalar_lea.vmem [#allocation2], %s250
        %s252 = smul.u32 2, %s22
        %p253 = scmp.lt.s32.totalorder %s252, 3
        %s254 = scalar_select %p253, %s252, 3
        %s255 = smul.addr %s254, 2
        %s256 = smul.addr %s255, 8
        %s257 = scalar_lea.vmem %s0, %s256
        %s258 = smul.u32 2, %s22
        %s259 = smul.u32 2, %s22
        %p260 = scmp.lt.s32.totalorder %s259, 3
        %s261 = scalar_select %p260, %s259, 3
        %s262 = smul.addr %s261, 2
        %s263 = smul.addr %s262, 8
        %s264 = scalar_lea.vmem %s1, %s263
        %s265 = smul.u32 2, %s22
        %p266 = scmp.lt.s32.totalorder %s23, 0
        %s267 = scalar_select %p266, %s23, 0
        %s268 = smul.addr %s267, 8
        %s269 = scalar_lea.vmem %s2, %s268
        %p270 = scmp.lt.s32.totalorder %s23, 0
        %s271 = scalar_select %p270, %s23, 0
        %s272 = smul.addr %s271, 8
        %s273 = scalar_lea.vmem %s3, %s272
        %s274 = smul.u32 2, %s22
        %v275 = vld [vmem:[%s257] sm:$0xff]
        %v276 = vld [vmem:[%s257 + $0x8] sm:$0xff]
        %v277 = vld [vmem:[%s257 + $0x10] sm:$0xff]
        %v278 = vld [vmem:[%s257 + $0x18] sm:$0xff]
        %v279 = vld [vmem:[%s264] sm:$0xff]
        %v280 = vld [vmem:[%s264 + $0x8] sm:$0xff]
        %v281 = vld [vmem:[%s264 + $0x10] sm:$0xff]
        %v282 = vld [vmem:[%s264 + $0x18] sm:$0xff]
        %v285 = vrot.slane %v276, 7
        %v286 = vrot.slane %v278, 7
        %vm291 = vcmask 1040384
        %v292 = vrot.slane %v275, 7
        %v293 = vsel %vm291, %v292, %v285
        %v294 = vrot.slane %v277, 7
        %v295 = vsel %vm291, %v294, %v286
        %v300 = vsel %vm291, %v285, %v292
        %v301 = vsel %vm291, %v286, %v294
        %vm302 = vcmask 1046528
        %v303 = vrot.slane %v275, 1
        %v304 = vrot.slane %v276, 1
        %v305 = vsel %vm302, %v303, %v304
        %v306 = vrot.slane %v277, 1
        %v307 = vrot.slane %v278, 1
        %v308 = vsel %vm302, %v306, %v307
        %v313 = vsel %vm302, %v304, %v303
        %v314 = vsel %vm302, %v307, %v306
        %v315 = vlaneseq
        %v316 = vand.u32 %v315, 127
        %317 = vset.pattern.permute.xlu0 0
        %318 = vperm.xlu0 %317, %v279
        %v319 = vpop.permute.xlu0 %318
        %320 = vset.pattern.permute.xlu0 0
        %321 = vperm.xlu0 %320, %v280
        %v322 = vpop.permute.xlu0 %321
        %323 = vset.pattern.permute.xlu0 0
        %324 = vperm.xlu0 %323, %v281
        %v325 = vpop.permute.xlu0 %324
        %326 = vset.pattern.permute.xlu0 0
        %327 = vperm.xlu0 %326, %v282
        %v328 = vpop.permute.xlu0 %327
        %vm329 = vcmp.eq.s32.totalorder %v319, %v316
        %vm330 = vcmp.eq.s32.totalorder %v322, %v316
        %vm331 = vcmp.eq.s32.totalorder %v325, %v316
        %vm332 = vcmp.eq.s32.totalorder %v328, %v316
        %v333 = vsel %vm329, 1, 0
        %v334 = vsel %vm330, 1, 0
        %v335 = vsel %vm331, 1, 0
        %v336 = vsel %vm332, 1, 0
        %v337 = vcvt.s32.f32 %v333
        %v338 = vcvt.s32.f32 %v334
        %v339 = vcvt.s32.f32 %v335
        %v340 = vcvt.s32.f32 %v336
        %341 = vset.pattern.permute.xlu0 1
        %342 = vperm.xlu0 %341, %v279
        %v343 = vpop.permute.xlu0 %342
        %344 = vset.pattern.permute.xlu0 1
        %345 = vperm.xlu0 %344, %v280
        %v346 = vpop.permute.xlu0 %345
        %347 = vset.pattern.permute.xlu0 1
        %348 = vperm.xlu0 %347, %v281
        %v349 = vpop.permute.xlu0 %348
        %350 = vset.pattern.permute.xlu0 1
        %351 = vperm.xlu0 %350, %v282
        %v352 = vpop.permute.xlu0 %351
        %vm353 = vcmp.eq.s32.totalorder %v343, %v316
        %vm354 = vcmp.eq.s32.totalorder %v346, %v316
        %vm355 = vcmp.eq.s32.totalorder %v349, %v316
        %vm356 = vcmp.eq.s32.totalorder %v352, %v316
        %v357 = vsel %vm353, 1, 0
        %v358 = vsel %vm354, 1, 0
        %v359 = vsel %vm355, 1, 0
        %v360 = vsel %vm356, 1, 0
        %v361 = vcvt.s32.f32 %v357
        %v362 = vcvt.s32.f32 %v358
        %v363 = vcvt.s32.f32 %v359
        %v364 = vcvt.s32.f32 %v360
        %365 = vset.pattern.permute.xlu0 2
        %366 = vperm.xlu0 %365, %v279
        %v367 = vpop.permute.xlu0 %366
        %368 = vset.pattern.permute.xlu0 2
        %369 = vperm.xlu0 %368, %v280
        %v370 = vpop.permute.xlu0 %369
        %371 = vset.pattern.permute.xlu0 2
        %372 = vperm.xlu0 %371, %v281
        %v373 = vpop.permute.xlu0 %372
        %374 = vset.pattern.permute.xlu0 2
        %375 = vperm.xlu0 %374, %v282
        %v376 = vpop.permute.xlu0 %375
        %vm377 = vcmp.eq.s32.totalorder %v367, %v316
        %vm378 = vcmp.eq.s32.totalorder %v370, %v316
        %vm379 = vcmp.eq.s32.totalorder %v373, %v316
        %vm380 = vcmp.eq.s32.totalorder %v376, %v316
        %v381 = vsel %vm377, 1, 0
        %v382 = vsel %vm378, 1, 0
        %v383 = vsel %vm379, 1, 0
        %v384 = vsel %vm380, 1, 0
        %v385 = vcvt.s32.f32 %v381
        %v386 = vcvt.s32.f32 %v382
        %v387 = vcvt.s32.f32 %v383
        %v388 = vcvt.s32.f32 %v384
        %389 = vset.pattern.permute.xlu0 3
        %390 = vperm.xlu0 %389, %v279
        %v391 = vpop.permute.xlu0 %390
        %392 = vset.pattern.permute.xlu0 3
        %393 = vperm.xlu0 %392, %v280
        %v394 = vpop.permute.xlu0 %393
        %395 = vset.pattern.permute.xlu0 3
        %396 = vperm.xlu0 %395, %v281
        %v397 = vpop.permute.xlu0 %396
        %398 = vset.pattern.permute.xlu0 3
        %399 = vperm.xlu0 %398, %v282
        %v400 = vpop.permute.xlu0 %399
        %vm401 = vcmp.eq.s32.totalorder %v391, %v316
        %vm402 = vcmp.eq.s32.totalorder %v394, %v316
        %vm403 = vcmp.eq.s32.totalorder %v397, %v316
        %vm404 = vcmp.eq.s32.totalorder %v400, %v316
        %v405 = vsel %vm401, 1, 0
        %v406 = vsel %vm402, 1, 0
        %v407 = vsel %vm403, 1, 0
        %v408 = vsel %vm404, 1, 0
        %v409 = vcvt.s32.f32 %v405
        %v410 = vcvt.s32.f32 %v406
        %v411 = vcvt.s32.f32 %v407
        %v412 = vcvt.s32.f32 %v408
        %413 = vrot.lane.b32.xlu0 %v275, 4
        %v414 = vpop.permute.xlu0 %413
        %415 = vrot.lane.b32.xlu0 %v276, 4
        %v416 = vpop.permute.xlu0 %415
        %417 = vrot.lane.b32.xlu0 %v277, 4
        %v418 = vpop.permute.xlu0 %417
        %419 = vrot.lane.b32.xlu0 %v278, 4
        %v420 = vpop.permute.xlu0 %419
        %427 = vrot.lane.b32.xlu0 %v305, 8
        %v428 = vpop.permute.xlu0 %427
        %429 = vrot.lane.b32.xlu0 %v313, 8
        %v430 = vpop.permute.xlu0 %429
        %431 = vrot.lane.b32.xlu0 %v308, 8
        %v432 = vpop.permute.xlu0 %431
        %433 = vrot.lane.b32.xlu0 %v314, 8
        %v434 = vpop.permute.xlu0 %433
        %443 = vrot.lane.b32.xlu0 %v337, 12
        %v444 = vpop.permute.xlu0 %443
        %445 = vrot.lane.b32.xlu0 %v338, 12
        %v446 = vpop.permute.xlu0 %445
        %447 = vrot.lane.b32.xlu0 %v339, 12
        %v448 = vpop.permute.xlu0 %447
        %449 = vrot.lane.b32.xlu0 %v340, 12
        %v450 = vpop.permute.xlu0 %449
        %459 = vrot.lane.b32.xlu0 %v361, 44
        %v460 = vpop.permute.xlu0 %459
        %461 = vrot.lane.b32.xlu0 %v362, 44
        %v462 = vpop.permute.xlu0 %461
        %463 = vrot.lane.b32.xlu0 %v363, 44
        %v464 = vpop.permute.xlu0 %463
        %465 = vrot.lane.b32.xlu0 %v364, 44
        %v466 = vpop.permute.xlu0 %465
        %475 = vrot.lane.b32.xlu0 %v385, 76
        %v476 = vpop.permute.xlu0 %475
        %477 = vrot.lane.b32.xlu0 %v386, 76
        %v478 = vpop.permute.xlu0 %477
        %479 = vrot.lane.b32.xlu0 %v387, 76
        %v480 = vpop.permute.xlu0 %479
        %481 = vrot.lane.b32.xlu0 %v388, 76
        %v482 = vpop.permute.xlu0 %481
        %491 = vrot.lane.b32.xlu0 %v409, 108
        %v492 = vpop.permute.xlu0 %491
        %493 = vrot.lane.b32.xlu0 %v410, 108
        %v494 = vpop.permute.xlu0 %493
        %495 = vrot.lane.b32.xlu0 %v411, 108
        %v496 = vpop.permute.xlu0 %495
        %497 = vrot.lane.b32.xlu0 %v412, 108
        %v498 = vpop.permute.xlu0 %497
        %vm503 = vcmask 31744
        %v504 = vsel %vm503, %v300, %v414
        %v505 = vsel %vm503, %v293, %v416
        %v506 = vsel %vm503, %v301, %v418
        %v507 = vsel %vm503, %v295, %v420
        %vm508 = vcmask 64512
        %v509 = vsel %vm508, %v504, %v428
        %v510 = vsel %vm508, %v505, %v430
        %v511 = vsel %vm508, %v506, %v432
        %v512 = vsel %vm508, %v507, %v434
        %vm513 = vcmask 97280
        %v514 = vsel %vm513, %v509, %v444
        %v515 = vsel %vm513, %v510, %v446
        %v516 = vsel %vm513, %v511, %v448
        %v517 = vsel %vm513, %v512, %v450
        %vm518 = vcmask 359424
        %v519 = vsel %vm518, %v514, %v460
        %v520 = vsel %vm518, %v515, %v462
        %v521 = vsel %vm518, %v516, %v464
        %v522 = vsel %vm518, %v517, %v466
        %vm523 = vcmask 621568
        %v524 = vsel %vm523, %v519, %v476
        %v525 = vsel %vm523, %v520, %v478
        %v526 = vsel %vm523, %v521, %v480
        %v527 = vsel %vm523, %v522, %v482
        %vm528 = vcmask 883712
        %v529 = vsel %vm528, %v524, %v492
        %v530 = vsel %vm528, %v525, %v494
        %v531 = vsel %vm528, %v526, %v496
        %v532 = vsel %vm528, %v527, %v498
        %v533 = vld [vmem:[%s269] sm:$0xff]
        %v534 = vld [vmem:[%s269 + $0x8] sm:$0xff]
        %v535 = vld [vmem:[%s269 + $0x10] sm:$0xff]
        %v536 = vld [vmem:[%s269 + $0x18] sm:$0xff]
        %v537 = vld [vmem:[%s269 + $0x20] sm:$0xff]
        %v538 = vld [vmem:[%s269 + $0x28] sm:$0xff]
        %v539 = vld [vmem:[%s269 + $0x30] sm:$0xff]
        %v540 = vld [vmem:[%s269 + $0x38] sm:$0xff]
        %v541 = vld [vmem:[%s269 + $0x40] sm:$0xff]
        %v542 = vld [vmem:[%s269 + $0x48] sm:$0xff]
        %v543 = vld [vmem:[%s269 + $0x50] sm:$0xff]
        %v544 = vld [vmem:[%s269 + $0x58] sm:$0xff]
        %v545 = vld [vmem:[%s269 + $0x60] sm:$0xff]
        %v546 = vld [vmem:[%s269 + $0x68] sm:$0xff]
        %v547 = vld [vmem:[%s269 + $0x70] sm:$0xff]
        %v548 = vld [vmem:[%s269 + $0x78] sm:$0xff]
        %v549 = vld [vmem:[%s269 + $0x80] sm:$0xff]
        %v550 = vld [vmem:[%s269 + $0x88] sm:$0xf]
        %v551 = vsel %vm513, %v492, 0
        %v553 = vsel %vm513, %v494, 0
        %v555 = vsel %vm513, %v496, 0
        %v557 = vsel %vm513, %v498, 0
        %vm559 = vcmask 1043456
        %v561 = vsel %vm559, %v550, 0
        %563 = vmatprep.subr.mxu0 0.0
        %564 = vmatpush1.msra.mxu0 %v548
        %565 = vmatprep.subr.mxu0 0.0
        %566 = vmatpush1.msra.mxu0 %v547
        %567 = vmatprep.subr.mxu0 0.0
        %568 = vmatpush1.msra.mxu0 %v546
        %569 = vmatprep.subr.mxu0 0.0
        %570 = vmatpush1.msra.mxu0 %v545
        %571 = vmatprep.subr.mxu0 0.0
        %572 = vmatpush1.msra.mxu0 %v544
        %573 = vmatprep.subr.mxu0 0.0
        %574 = vmatpush1.msra.mxu0 %v543
        %575 = vmatprep.subr.mxu0 0.0
        %576 = vmatpush1.msra.mxu0 %v542
        %577 = vmatprep.subr.mxu0 0.0
        %578 = vmatpush1.msra.mxu0 %v541
        %579 = vmatprep.subr.mxu0 0.0
        %580 = vmatpush1.msra.mxu0 %v540
        %581 = vmatprep.subr.mxu0 0.0
        %582 = vmatpush1.msra.mxu0 %v539
        %583 = vmatprep.subr.mxu0 0.0
        %584 = vmatpush1.msra.mxu0 %v538
        %585 = vmatprep.subr.mxu0 0.0
        %586 = vmatpush1.msra.mxu0 %v537
        %587 = vmatprep.subr.mxu0 0.0
        %588 = vmatpush1.msra.mxu0 %v536
        %589 = vmatprep.subr.mxu0 0.0
        %590 = vmatpush1.msra.mxu0 %v535
        %591 = vmatprep.subr.mxu0 0.0
        %592 = vmatpush1.msra.mxu0 %v534
        %593 = vmatprep.subr.mxu0 0.0
        %594 = vmatpush1.msra.mxu0 %v533
        %595 = vmatprep.subr.mxu0 0.0
        %596 = vmatpush2.msra.mxu0 0.0
        %597 = vmatprep.subr.mxu0 0.0
        %598 = vmatpush2.msra.mxu0 0.0
        %599 = vmatprep.subr.mxu0 0.0
        %600 = vmatpush2.msra.mxu0 0.0
        %601 = vmatprep.subr.mxu0 0.0
        %602 = vmatpush2.msra.mxu0 0.0
        %603 = vmatprep.subr.mxu0 0.0
        %604 = vmatpush2.msra.mxu0 0.0
        %605 = vmatprep.subr.mxu0 0.0
        %606 = vmatpush2.msra.mxu0 0.0
        %607 = vmatprep.subr.mxu0 0.0
        %608 = vmatpush2.msra.mxu0 0.0
        %609 = vmatprep.subr.mxu0 0.0
        %610 = vmatpush2.msra.mxu0 0.0
        %611 = vmatprep.subr.mxu0 0.0
        %612 = vmatpush2.msra.mxu0 0.0
        %613 = vmatprep.subr.mxu0 0.0
        %614 = vmatpush2.msra.mxu0 0.0
        %615 = vmatprep.subr.mxu0 0.0
        %616 = vmatpush2.msra.mxu0 0.0
        %617 = vmatprep.subr.mxu0 0.0
        %618 = vmatpush2.msra.mxu0 0.0
        %619 = vmatprep.subr.mxu0 0.0
        %620 = vmatpush2.msra.mxu0 0.0
        %621 = vmatprep.subr.mxu0 0.0
        %622 = vmatpush2.msra.mxu0 0.0
        %623 = vmatprep.subr.mxu0 0.0
        %624 = vmatpush2.msra.mxu0 %v561
        %625 = vmatprep.subr.mxu0 0.0
        %626 = vmatpush2.msra.mxu0 %v549
        %627 = vmatprep.mubr.f32.mxu0 %v551
        %628 = vmatmul.mubr.f32.gmra.mxu0 %v529
        %v629 = vpop.f32.mrf.mxu0
        %v630 = vadd.f32 0.0, %v629
        %v631 = vpop.f32.mrf.mxu0
        %632 = vmatprep.mubr.f32.mxu0 %v553
        %633 = vmatmul.mubr.f32.gmra.mxu0 %v530
        %v634 = vpop.f32.mrf.mxu0
        %v635 = vadd.f32 0.0, %v634
        %v636 = vpop.f32.mrf.mxu0
        %637 = vmatprep.mubr.f32.mxu0 %v555
        %638 = vmatmul.mubr.f32.gmra.mxu0 %v531
        %v639 = vpop.f32.mrf.mxu0
        %v640 = vadd.f32 0.0, %v639
        %v641 = vpop.f32.mrf.mxu0
        %642 = vmatprep.mubr.f32.mxu0 %v557
        %643 = vmatmul.mubr.f32.gmra.mxu0 %v532
        %v644 = vpop.f32.mrf.mxu0
        %v645 = vadd.f32 0.0, %v644
        %v646 = vpop.f32.mrf.mxu0
        %647 = vdwg.mxu0
        %v648 = vld [vmem:[%s273] sm:$0xff]
        %v649 = vld [vmem:[%s273 + $0x8] sm:$0xff]
        %v650 = vadd.f32 %v630, %v648
        %v651 = vadd.f32 %v635, %v649
        %v652 = vadd.f32 %v640, %v648
        %v653 = vadd.f32 %v645, %v649
        %654 = vst [vmem:[%s251] sm:$0xff] %v650
        %655 = vst [vmem:[%s251 + $0x8] sm:$0xff] %v651
        %656 = vst [vmem:[%s251 + $0x10] sm:$0xff] %v652
        %657 = vst [vmem:[%s251 + $0x18] sm:$0xff] %v653
        %s658 = sand.u32 %s144, 1
        %s659 = scalar_lea.sflag [#allocation3], %s658
        %s660 = sand.u32 %s144, 1
        %s661 = smul.addr %s660, 32
        %s662 = scalar_lea.vmem [#allocation2], %s661
        // Predicated region
        $region37: #{tpu_custom_call.1} parent=35 // pred_check
          %p663 = pneg %p154
        $region38: #{tpu_custom_call.1} parent=35 // pred_check_branch
          %665 = sbr.rel (%p663) target = $region40
        $region39: #{tpu_custom_call.1} parent=35 // pred_region
          %s666 = smul.u32 2, %s22
          %s668 = ssub.s32 512, 512
          %669 = vsyncadd %s659, %s668
          %s670 = smul.addr %s666, 2
          %s671 = sadd.s32 %s23, %s670
          %s672 = smul.addr %s671, 128
          %s673 = scalar_lea.hbm %s4, %s672
          %s674 = sshll.u32 %s662, 4
          %s675 = int_to_ptr.vmem [resolvable:$true] %s674
          %680 = dma.vmem_to_hbm [thread:$0]  %s675, 512, %s673, %s659, 128, 128, 8
        $region40: #{tpu_custom_call.1} parent=35 // pred_fallthru
          _
      $region36: #{tpu_custom_call.1} parent=5 // pred_fallthru
        _
      %p681 = scmp.le.s32.totalorder 2, %s13
      // Predicated region
      $region41: #{tpu_custom_call.1} parent=5 // pred_check
        %p682 = pneg %p681
      $region42: #{tpu_custom_call.1} parent=5 // pred_check_branch
        %684 = sbr.rel (%p682) target = $region44
      $region43: #{tpu_custom_call.1} parent=5 // pred_region
        %s685 = ssub.s32 %s13, 2
        // Predicated region
        $region45: #{tpu_custom_call.1} parent=43 // pred_check
          %p686 = pneg %p160
        $region46: #{tpu_custom_call.1} parent=43 // pred_check_branch
          %688 = sbr.rel (%p686) target = $region48
        $region47: #{tpu_custom_call.1} parent=43 // pred_region
          %s689 = sand.u32 %s145, 1
          %s690 = scalar_lea.sflag [#allocation3], %s689
          %s691 = sand.u32 %s145, 1
          %s692 = smul.addr %s691, 32
          %s693 = scalar_lea.vmem [#allocation2], %s692
          %694 = dma.done %s690, 512
        $region48: #{tpu_custom_call.1} parent=43 // pred_fallthru
          _
      $region44: #{tpu_custom_call.1} parent=5 // pred_fallthru
        _
    $region6: #{tpu_custom_call.1} parent=1 // loop_footer
      %s17 = sadd.s32 1, %s13
    $region7: #{tpu_custom_call.1} parent=1 // loop_footer_branch
      %12 = sbr.rel target = $region3
    $region8: #{tpu_custom_call.1} parent=1 // loop_exit
      _
    %695 = vsyncpa [#allocation3], 1
    %s696 = scalar_lea.sflag [#allocation3], 1
    %697 = vsyncpa %s696, 1

</llo_original>
